<compile_context>
chip_gen: v5e
topology: v5e:2x2
jax: 0.10.0
libtpu: 0.0.40
codegen_flags: <defaults>
</compile_context>

<pallas_src>
import functools

import jax
import jax.numpy as jnp
from jax.experimental import pallas as pl
from jax.experimental.pallas import tpu as pltpu

LANES = 128
SUBLANES = 8
MAX_TILE_ROWS = 1024   # 1024x128 f32 = 512 KiB / input block; ~2 MiB double-buffered


def _berhu_kernel(pred_ref, gt_ref, out_ref,
                  max_acc, cnt_acc, sum_acc, thr_smem,
                  *, scale, eps, total_rows, tile_rows):
    p = pl.program_id(0)          # 0: max/count pass, 1: BerHu-sum pass
    i = pl.program_id(1)          # row-tile index
    n_tiles = pl.num_programs(1)

    @pl.when((p == 0) & (i == 0))
    def _init():
        max_acc[...] = jnp.zeros_like(max_acc)
        cnt_acc[...] = jnp.zeros_like(cnt_acc)
        sum_acc[...] = jnp.zeros_like(sum_acc)

    pred = pred_ref[...].astype(jnp.float32)
    gt = gt_ref[...].astype(jnp.float32)

    # In-kernel tail masking: rows >= total_rows belong to the (possibly
    # partial) last block and must not contribute.  Zero-padded elements are
    # excluded automatically by gt > eps.
    row_ids = jax.lax.broadcasted_iota(jnp.int32, pred.shape, 0) + i * tile_rows
    valid = (row_ids < total_rows) & (gt > eps)

    diff = jnp.abs(pred - gt)
    groups = tile_rows // SUBLANES

    @pl.when(p == 0)
    def _pass_max_count():
        d = jnp.where(valid, diff, 0.0)
        c = valid.astype(jnp.float32)
        d8 = d.reshape(groups, SUBLANES, LANES)
        c8 = c.reshape(groups, SUBLANES, LANES)
        # vreg-shaped accumulation: pure VPU work in the steady-state loop.
        max_acc[...] = jnp.maximum(max_acc[...], d8.max(axis=0))
        cnt_acc[...] = cnt_acc[...] + c8.sum(axis=0)

        @pl.when(i == n_tiles - 1)
        def _finalize_threshold():
            thr_smem[0] = scale * jnp.max(max_acc[...])

    @pl.when(p == 1)
    def _pass_sum():
        thr = thr_smem[0]
        inv_den = 1.0 / (2.0 * thr + eps)
        quad = (diff * diff + thr * thr) * inv_den
        term = jnp.where(diff > thr, quad, diff)
        term = jnp.where(valid, term, 0.0)
        t8 = term.reshape(groups, SUBLANES, LANES)
        sum_acc[...] = sum_acc[...] + t8.sum(axis=0)

        @pl.when(i == n_tiles - 1)
        def _finalize_loss():
            total = jnp.sum(sum_acc[...])
            count = jnp.sum(cnt_acc[...])
            out_ref[0, 0] = total / count


def berhu_loss(pred, gt, scale=0.5, eps=1e-5):
    """Equivalent of BerHuLoss_test(scale, eps).forward(pred, gt)."""
    assert pred.shape == gt.shape
    n = pred.size

    flat_p = jnp.ravel(pred).astype(jnp.float32)
    flat_g = jnp.ravel(gt).astype(jnp.float32)

    # Round up to one (8,128) vreg so the 2-D slab is sublane-aligned.  At
    # most 1023 zero elements are added (and skipped entirely when the size
    # already divides, as in the test shape), and zeros are masked out by
    # gt > eps inside the kernel.
    chunk = SUBLANES * LANES
    padded = ((n + chunk - 1) // chunk) * chunk
    pad = padded - n
    if pad:
        flat_p = jnp.pad(flat_p, (0, pad))
        flat_g = jnp.pad(flat_g, (0, pad))

    rows = padded // LANES                 # multiple of 8
    p2 = flat_p.reshape(rows, LANES)
    g2 = flat_g.reshape(rows, LANES)

    tile_rows = min(MAX_TILE_ROWS, rows)   # multiple of 8 (full dim if small)
    n_tiles = (rows + tile_rows - 1) // tile_rows

    kernel = functools.partial(
        _berhu_kernel,
        scale=float(scale), eps=float(eps),
        total_rows=rows, tile_rows=tile_rows)

    loss = pl.pallas_call(
        kernel,
        out_shape=jax.ShapeDtypeStruct((1, 1), jnp.float32),
        grid_spec=pltpu.PrefetchScalarGridSpec(
            num_scalar_prefetch=0,
            grid=(2, n_tiles),
            in_specs=[
                pl.BlockSpec((tile_rows, LANES), lambda p, i: (i, 0)),
                pl.BlockSpec((tile_rows, LANES), lambda p, i: (i, 0)),
            ],
            out_specs=pl.BlockSpec(memory_space=pltpu.MemorySpace.SMEM),
            scratch_shapes=[
                pltpu.VMEM((SUBLANES, LANES), jnp.float32),  # running max |d|
                pltpu.VMEM((SUBLANES, LANES), jnp.float32),  # running valid count
                pltpu.VMEM((SUBLANES, LANES), jnp.float32),  # running BerHu sum
                pltpu.SMEM((1,), jnp.float32),               # threshold scalar
            ],
        ),
        compiler_params=pltpu.CompilerParams(
            dimension_semantics=("arbitrary", "arbitrary")),
    )(p2, g2)

    return loss[0, 0]


if __name__ == "__main__":
    key = jax.random.PRNGKey(0)
    k1, k2 = jax.random.split(key)
    # NCHW: batch=2, channels=4, spatial=16x16 (2048 elements -> no padding).
    pred = jax.random.normal(k1, (2, 4, 16, 16), dtype=jnp.float32)
    gt = jax.random.normal(k2, (2, 4, 16, 16), dtype=jnp.float32)

    loss = berhu_loss(pred, gt)
    loss = jax.block_until_ready(loss)

    # Pure-JAX reference with the same semantics as the PyTorch module.
    scale, eps = 0.5, 1e-5
    valid = gt > eps
    d = jnp.abs(pred - gt)
    thr = scale * jnp.max(jnp.where(valid, d, 0.0))
    quad = (d * d + thr * thr) / (2.0 * thr + eps)
    term = jnp.where(d > thr, quad, d)
    ref = jnp.sum(jnp.where(valid, term, 0.0)) / jnp.sum(valid)

    assert jnp.allclose(loss, ref, rtol=1e-4, atol=1e-6), (loss, ref)
    print("KERNEL_OK")
</pallas_src>

<mosaic_0001>
module attributes {stable_mosaic.version = 11 : i64} {
  func.func @_berhu_kernel(%arg0: i32, %arg1: i32, %arg2: memref<16x128xf32, #tpu.memory_space<vmem>>, %arg3: memref<16x128xf32, #tpu.memory_space<vmem>>, %arg4: memref<1x1xf32, #tpu.memory_space<smem>>, %arg5: memref<8x128xf32, #tpu.memory_space<vmem>>, %arg6: memref<8x128xf32, #tpu.memory_space<vmem>>, %arg7: memref<8x128xf32, #tpu.memory_space<vmem>>, %arg8: memref<1xf32, #tpu.memory_space<smem>>) attributes {dimension_semantics = [#tpu.dimension_semantics<arbitrary>, #tpu.dimension_semantics<arbitrary>], iteration_bounds = array<i64: 2, 1>, scalar_prefetch = 0 : i64, scratch_operands = 4 : i64, tpu.core_type = #tpu.core_type<tc>, window_params = [{transform_indices = @transform_0, window_bounds = array<i64: 16, 128>}, {transform_indices = @transform_1, window_bounds = array<i64: 16, 128>}, {transform_indices = @transform_2, window_bounds = array<i64: 1, 1>}]} {
    %c0_i32 = arith.constant 0 : i32
    %0 = arith.cmpi eq, %arg0, %c0_i32 : i32
    %c0_i32_0 = arith.constant 0 : i32
    %1 = arith.cmpi eq, %arg1, %c0_i32_0 : i32
    %2 = arith.andi %0, %1 : i1
    %3 = arith.extui %2 : i1 to i32
    %c0_i32_1 = arith.constant 0 : i32
    %4 = arith.cmpi ne, %3, %c0_i32_1 : i32
    scf.if %4 {
      %cst_9 = arith.constant 0.000000e+00 : f32
      %24 = vector.broadcast %cst_9 : f32 to vector<8x128xf32>
      %c0_10 = arith.constant 0 : index
      %c0_11 = arith.constant 0 : index
      %25 = vector.load %arg5[%c0_10, %c0_11] : memref<8x128xf32, #tpu.memory_space<vmem>>, vector<8x128xf32>
      tpu.vector_store %arg5[%c0_10, %c0_11], %24 {strides = array<i32>} : memref<8x128xf32, #tpu.memory_space<vmem>>, vector<8x128xf32>,
      %cst_12 = arith.constant 0.000000e+00 : f32
      %26 = vector.broadcast %cst_12 : f32 to vector<8x128xf32>
      %c0_13 = arith.constant 0 : index
      %c0_14 = arith.constant 0 : index
      %27 = vector.load %arg6[%c0_13, %c0_14] : memref<8x128xf32, #tpu.memory_space<vmem>>, vector<8x128xf32>
      tpu.vector_store %arg6[%c0_13, %c0_14], %26 {strides = array<i32>} : memref<8x128xf32, #tpu.memory_space<vmem>>, vector<8x128xf32>,
      %cst_15 = arith.constant 0.000000e+00 : f32
      %28 = vector.broadcast %cst_15 : f32 to vector<8x128xf32>
      %c0_16 = arith.constant 0 : index
      %c0_17 = arith.constant 0 : index
      %29 = vector.load %arg7[%c0_16, %c0_17] : memref<8x128xf32, #tpu.memory_space<vmem>>, vector<8x128xf32>
      tpu.vector_store %arg7[%c0_16, %c0_17], %28 {strides = array<i32>} : memref<8x128xf32, #tpu.memory_space<vmem>>, vector<8x128xf32>,
    } else {
    }
    %c0 = arith.constant 0 : index
    %c0_2 = arith.constant 0 : index
    %5 = vector.load %arg2[%c0, %c0_2] : memref<16x128xf32, #tpu.memory_space<vmem>>, vector<16x128xf32>
    %c0_3 = arith.constant 0 : index
    %c0_4 = arith.constant 0 : index
    %6 = vector.load %arg3[%c0_3, %c0_4] : memref<16x128xf32, #tpu.memory_space<vmem>>, vector<16x128xf32>
    %7 = tpu.iota {dimensions = array<i32: 0>} : vector<16x128xi32>
    %c16_i32 = arith.constant 16 : i32
    %8 = arith.muli %arg1, %c16_i32 : i32
    %9 = vector.broadcast %8 : i32 to vector<16x128xi32>
    %10 = arith.addi %7, %9 : vector<16x128xi32>
    %c16_i32_5 = arith.constant 16 : i32
    %11 = vector.broadcast %c16_i32_5 : i32 to vector<16x128xi32>
    %12 = arith.cmpi slt, %10, %11 : vector<16x128xi32>
    %cst = arith.constant 9.99999974E-6 : f32
    %13 = vector.broadcast %cst : f32 to vector<16x128xf32>
    %14 = arith.cmpf ogt, %6, %13 : vector<16x128xf32>
    %15 = arith.andi %12, %14 : vector<16x128xi1>
    %16 = arith.subf %5, %6 : vector<16x128xf32>
    %17 = math.absf %16 : vector<16x128xf32>
    %c0_i32_6 = arith.constant 0 : i32
    %18 = arith.cmpi eq, %arg0, %c0_i32_6 : i32
    %19 = arith.extui %18 : i1 to i32
    %c0_i32_7 = arith.constant 0 : i32
    %20 = arith.cmpi ne, %19, %c0_i32_7 : i32
    scf.if %20 {
      %cst_9 = arith.constant 0.000000e+00 : f32
      %24 = vector.broadcast %cst_9 : f32 to vector<16x128xf32>
      %25 = arith.select %15, %17, %24 : vector<16x128xi1>, vector<16x128xf32>
      %26 = arith.extui %15 : vector<16x128xi1> to vector<16x128xi32>
      %27 = arith.sitofp %26 : vector<16x128xi32> to vector<16x128xf32>
      %28 = vector.shape_cast %25 : vector<16x128xf32> to vector<2x8x128xf32>
      %29 = vector.shape_cast %27 : vector<16x128xf32> to vector<2x8x128xf32>
      %c0_10 = arith.constant 0 : index
      %c0_11 = arith.constant 0 : index
      %30 = vector.load %arg5[%c0_10, %c0_11] : memref<8x128xf32, #tpu.memory_space<vmem>>, vector<8x128xf32>
      %cst_12 = arith.constant dense<0xFF800000> : vector<8x128xf32>
      %31 = vector.multi_reduction <maximumf>, %28, %cst_12 [0] : vector<2x8x128xf32> to vector<8x128xf32>
      %32 = arith.maximumf %30, %31 : vector<8x128xf32>
      %c0_13 = arith.constant 0 : index
      %c0_14 = arith.constant 0 : index
      %33 = vector.load %arg5[%c0_13, %c0_14] : memref<8x128xf32, #tpu.memory_space<vmem>>, vector<8x128xf32>
      tpu.vector_store %arg5[%c0_13, %c0_14], %32 {strides = array<i32>} : memref<8x128xf32, #tpu.memory_space<vmem>>, vector<8x128xf32>,
      %c0_15 = arith.constant 0 : index
      %c0_16 = arith.constant 0 : index
      %34 = vector.load %arg6[%c0_15, %c0_16] : memref<8x128xf32, #tpu.memory_space<vmem>>, vector<8x128xf32>
      %cst_17 = arith.constant dense<0.000000e+00> : vector<8x128xf32>
      %35 = vector.multi_reduction <add>, %29, %cst_17 [0] : vector<2x8x128xf32> to vector<8x128xf32>
      %36 = arith.addf %34, %35 : vector<8x128xf32>
      %c0_18 = arith.constant 0 : index
      %c0_19 = arith.constant 0 : index
      %37 = vector.load %arg6[%c0_18, %c0_19] : memref<8x128xf32, #tpu.memory_space<vmem>>, vector<8x128xf32>
      tpu.vector_store %arg6[%c0_18, %c0_19], %36 {strides = array<i32>} : memref<8x128xf32, #tpu.memory_space<vmem>>, vector<8x128xf32>,
      %c0_i32_20 = arith.constant 0 : i32
      %38 = arith.cmpi eq, %arg1, %c0_i32_20 : i32
      %39 = arith.extui %38 : i1 to i32
      %c0_i32_21 = arith.constant 0 : i32
      %40 = arith.cmpi ne, %39, %c0_i32_21 : i32
      scf.if %40 {
        %c0_22 = arith.constant 0 : index
        %c0_23 = arith.constant 0 : index
        %41 = vector.load %arg5[%c0_22, %c0_23] : memref<8x128xf32, #tpu.memory_space<vmem>>, vector<8x128xf32>
        %42 = vector.shape_cast %41 : vector<8x128xf32> to vector<1x8x128xf32>
        %cst_24 = arith.constant dense<0xFF800000> : vector<1xf32>
        %43 = vector.multi_reduction <maximumf>, %42, %cst_24 [1, 2] : vector<1x8x128xf32> to vector<1xf32>
        %44 = vector.shape_cast %43 : vector<1xf32> to vector<1x1x1xf32>
        %45 = vector.extract %44[0, 0, 0] : f32 from vector<1x1x1xf32>
        %cst_25 = arith.constant 5.000000e-01 : f32
        %46 = arith.mulf %cst_25, %45 : f32
        %c0_26 = arith.constant 0 : index
        %47 = memref.load %arg8[%c0_26] : memref<1xf32, #tpu.memory_space<smem>>
        memref.store %46, %arg8[%c0_26] : memref<1xf32, #tpu.memory_space<smem>>
      } else {
      }
    } else {
    }
    %c1_i32 = arith.constant 1 : i32
    %21 = arith.cmpi eq, %arg0, %c1_i32 : i32
    %22 = arith.extui %21 : i1 to i32
    %c0_i32_8 = arith.constant 0 : i32
    %23 = arith.cmpi ne, %22, %c0_i32_8 : i32
    scf.if %23 {
      %c0_9 = arith.constant 0 : index
      %24 = memref.load %arg8[%c0_9] : memref<1xf32, #tpu.memory_space<smem>>
      %cst_10 = arith.constant 2.000000e+00 : f32
      %25 = arith.mulf %cst_10, %24 : f32
      %cst_11 = arith.constant 9.99999974E-6 : f32
      %26 = arith.addf %25, %cst_11 : f32
      %cst_12 = arith.constant 1.000000e+00 : f32
      %27 = arith.divf %cst_12, %26 : f32
      %28 = arith.mulf %17, %17 : vector<16x128xf32>
      %29 = arith.mulf %24, %24 : f32
      %30 = vector.broadcast %29 : f32 to vector<16x128xf32>
      %31 = arith.addf %28, %30 : vector<16x128xf32>
      %32 = vector.broadcast %27 : f32 to vector<16x128xf32>
      %33 = arith.mulf %31, %32 : vector<16x128xf32>
      %34 = vector.broadcast %24 : f32 to vector<16x128xf32>
      %35 = arith.cmpf ogt, %17, %34 : vector<16x128xf32>
      %36 = arith.select %35, %33, %17 : vector<16x128xi1>, vector<16x128xf32>
      %cst_13 = arith.constant 0.000000e+00 : f32
      %37 = vector.broadcast %cst_13 : f32 to vector<16x128xf32>
      %38 = arith.select %15, %36, %37 : vector<16x128xi1>, vector<16x128xf32>
      %39 = vector.shape_cast %38 : vector<16x128xf32> to vector<2x8x128xf32>
      %c0_14 = arith.constant 0 : index
      %c0_15 = arith.constant 0 : index
      %40 = vector.load %arg7[%c0_14, %c0_15] : memref<8x128xf32, #tpu.memory_space<vmem>>, vector<8x128xf32>
      %cst_16 = arith.constant dense<0.000000e+00> : vector<8x128xf32>
      %41 = vector.multi_reduction <add>, %39, %cst_16 [0] : vector<2x8x128xf32> to vector<8x128xf32>
      %42 = arith.addf %40, %41 : vector<8x128xf32>
      %c0_17 = arith.constant 0 : index
      %c0_18 = arith.constant 0 : index
      %43 = vector.load %arg7[%c0_17, %c0_18] : memref<8x128xf32, #tpu.memory_space<vmem>>, vector<8x128xf32>
      tpu.vector_store %arg7[%c0_17, %c0_18], %42 {strides = array<i32>} : memref<8x128xf32, #tpu.memory_space<vmem>>, vector<8x128xf32>,
      %c0_i32_19 = arith.constant 0 : i32
      %44 = arith.cmpi eq, %arg1, %c0_i32_19 : i32
      %45 = arith.extui %44 : i1 to i32
      %c0_i32_20 = arith.constant 0 : i32
      %46 = arith.cmpi ne, %45, %c0_i32_20 : i32
      scf.if %46 {
        %c0_21 = arith.constant 0 : index
        %c0_22 = arith.constant 0 : index
        %47 = vector.load %arg7[%c0_21, %c0_22] : memref<8x128xf32, #tpu.memory_space<vmem>>, vector<8x128xf32>
        %48 = vector.shape_cast %47 : vector<8x128xf32> to vector<1x8x128xf32>
        %cst_23 = arith.constant dense<0.000000e+00> : vector<1xf32>
        %49 = vector.multi_reduction <add>, %48, %cst_23 [1, 2] : vector<1x8x128xf32> to vector<1xf32>
        %50 = vector.shape_cast %49 : vector<1xf32> to vector<1x1x1xf32>
        %51 = vector.extract %50[0, 0, 0] : f32 from vector<1x1x1xf32>
        %c0_24 = arith.constant 0 : index
        %c0_25 = arith.constant 0 : index
        %52 = vector.load %arg6[%c0_24, %c0_25] : memref<8x128xf32, #tpu.memory_space<vmem>>, vector<8x128xf32>
        %53 = vector.shape_cast %52 : vector<8x128xf32> to vector<1x8x128xf32>
        %cst_26 = arith.constant dense<0.000000e+00> : vector<1xf32>
        %54 = vector.multi_reduction <add>, %53, %cst_26 [1, 2] : vector<1x8x128xf32> to vector<1xf32>
        %55 = vector.shape_cast %54 : vector<1xf32> to vector<1x1x1xf32>
        %56 = vector.extract %55[0, 0, 0] : f32 from vector<1x1x1xf32>
        %57 = arith.divf %51, %56 : f32
        %c0_27 = arith.constant 0 : index
        %c0_28 = arith.constant 0 : index
        %58 = memref.load %arg4[%c0_27, %c0_28] : memref<1x1xf32, #tpu.memory_space<smem>>
        memref.store %57, %arg4[%c0_27, %c0_28] : memref<1x1xf32, #tpu.memory_space<smem>>
      } else {
      }
    } else {
    }
    return
  }
  func.func @transform_0(%arg0: i32, %arg1: i32) -> (i32, i32) {
    %c0_i32 = arith.constant 0 : i32
    %c0_i32_0 = arith.constant 0 : i32
    return %arg1, %c0_i32 : i32, i32
  }
  func.func @transform_1(%arg0: i32, %arg1: i32) -> (i32, i32) {
    %c0_i32 = arith.constant 0 : i32
    %c0_i32_0 = arith.constant 0 : i32
    return %arg1, %c0_i32 : i32, i32
  }
  func.func @transform_2(%arg0: i32, %arg1: i32) -> (i32, i32) {
    %c0_i32 = arith.constant 0 : i32
    %c0_i32_0 = arith.constant 0 : i32
    %c0_i32_1 = arith.constant 0 : i32
    return %c0_i32, %c0_i32_0 : i32, i32
  }
}

</mosaic_0001>

<llo_original>
// kernel: tpu_custom_call.1
$region0: #{tpu_custom_call.1}
  #allocation0 [shape = 'u32[]', space=smem, size = 0x4, offset = 0x4, fixed_abs, tag = 'smem constant byte address 0x4 - core index']
  #allocation1 [shape = 'u32[72,128]{1,0:T(1,128)}', space=vmem, size = 0x9000, scoped, tag = 'internal scratch']
  #allocation2 [shape = 'f32[8,128]{1,0:T(8,128)}', space=vmem, size = 0x1000, scoped, tag = 'scratch operand']
  #allocation3 [shape = 'f32[8,128]{1,0:T(8,128)}', space=vmem, size = 0x1000, scoped, tag = 'scratch operand']
  #allocation4 [shape = 'f32[8,128]{1,0:T(8,128)}', space=vmem, size = 0x1000, scoped, tag = 'scratch operand']
  #allocation5 [shape = 'f32[1]{0:T(128)}', space=smem, size = 0x200, scoped, tag = 'scratch operand']
  %s0 = inlined_call_operand.hbm [shape: f32[16,128], index: 0, kind: input, shape index: {}]
  %s1 = inlined_call_operand.hbm [shape: f32[16,128], index: 1, kind: input, shape index: {}]
  %s2 = inlined_call_operand.hbm [shape: f32[1,1], index: 2, kind: output, shape index: {}]
  %s3 = sld [smem:[#allocation0]]
  $region69: #{tpu_custom_call.1} parent=0
    _
  %s5 = ssub.s32 1, %s3
  %s6 = scalar_select 0, %s5, %s3
  $region1: #{tpu_custom_call.1} parent=0
    #allocation6 [shape = 'u8[8192]{0}', space=vmem, size = 0x2000, scoped, tag = 'input window, operand 0, single buffered']
    #allocation7 [shape = 's32[2]{0}', space=sflag, size = 0x8, scoped, tag = 'scoped memory for tpu_custom_call.1']
    #allocation8 [shape = 's32[2]{0}', space=sflag, size = 0x8, scoped, tag = 'scoped memory for tpu_custom_call.1']
    #allocation9 [shape = 'u8[8192]{0}', space=vmem, size = 0x2000, scoped, tag = 'input window, operand 1, single buffered']
    #allocation10 [shape = 's32[1]{0}', space=sflag, size = 0x4, scoped, tag = 'scoped memory for tpu_custom_call.1']
    #allocation11 [shape = 'u8[512]{0}', space=smem, size = 0x200, scoped, tag = 'output window, operand 0, single buffered']
    %7 = vsyncpa [#allocation7], 0
    %8 = vsyncpa [#allocation10], 0
    %9 = vsyncpa [#allocation8], 0
    loop: start=0, step=1, limit=4
    $region2: #{tpu_custom_call.1} parent=1 // loop_pre_header
      _
    $region3: #{tpu_custom_call.1} parent=1 // loop_header
      %s11 = sphi 0, %s15
      %p12 = scmp.ge.s32.totalorder %s11, 4
      %s18 = sphi 0, %s30
      %s19 = sphi 0, %s26
      %s20 = sphi 0, %s18
      %s21 = sphi 0, %s19
      %s22 = sphi 0, %s20
      %s23 = sphi 0, %s21
      %s33 = sphi 0, %s35
      %s36 = sphi 0, %s33
      %s37 = sphi 0, %s36
      %s53 = sphi 0, %s37
      %s59 = sphi 0, %s61
      %s62 = sphi 0, %s59
      %s63 = sphi 0, %s62
      %s79 = sphi 0, %s63
      %s83 = sphi 0, %s83
      %s85 = sphi 0, %s83
      %s86 = sphi 0, %s85
      %s100 = sphi 0, %s86
    $region4: #{tpu_custom_call.1} parent=1 // loop_header_branch
      %14 = sbr.rel (%p12) target = $region8
    $region5: #{tpu_custom_call.1} parent=1 // loop_body
      %s16 = ssub.s32 %s11, 1
      %s17 = ssub.s32 %s11, 2
      %s24 = sadd.s32 1, %s19
      %p25 = scmp.ge.s32.totalorder %s24, 1
      %s26 = scalar_select %p25, 0, %s24
      %s27 = sadd.s32 1, %s18
      %s28 = scalar_select %p25, %s27, %s18
      %p29 = scmp.ge.s32.totalorder %s28, 2
      %s30 = scalar_select %p29, 0, %s28
      %s31 = ssub.s32 %s19, %s26
      %p32 = scmp.eq.s32.totalorder %s31, 0
      %s34 = sadd.s32 %s33, 1
      %s35 = scalar_select %p32, %s33, %s34
      %p38 = pneg %p32
      %p39 = scmp.eq.s32.totalorder %s11, 1
      %p40 = por %p38, %p39
      %p41 = scmp.ne.s32.totalorder %s33, %s36
      %p42 = scmp.eq.s32.totalorder %s11, 0
      %p43 = por %p41, %p42
      %p44 = scmp.ne.s32.totalorder %s33, %s36
      %p45 = scmp.eq.s32.totalorder %s16, 1
      %p46 = por %p44, %p45
      %p47 = scmp.ne.s32.totalorder %s36, %s37
      %p48 = scmp.eq.s32.totalorder %s16, 0
      %p49 = por %p47, %p48
      %p50 = scmp.ne.s32.totalorder %s36, %s37
      %p51 = scmp.eq.s32.totalorder %s17, 1
      %p52 = por %p50, %p51
      %p54 = scmp.ne.s32.totalorder %s37, %s53
      %p55 = scmp.eq.s32.totalorder %s17, 0
      %p56 = por %p54, %p55
      %s57 = ssub.s32 %s19, %s26
      %p58 = scmp.eq.s32.totalorder %s57, 0
      %s60 = sadd.s32 %s59, 1
      %s61 = scalar_select %p58, %s59, %s60
      %p64 = pneg %p58
      %p65 = scmp.eq.s32.totalorder %s11, 1
      %p66 = por %p64, %p65
      %p67 = scmp.ne.s32.totalorder %s59, %s62
      %p68 = scmp.eq.s32.totalorder %s11, 0
      %p69 = por %p67, %p68
      %p70 = scmp.ne.s32.totalorder %s59, %s62
      %p71 = scmp.eq.s32.totalorder %s16, 1
      %p72 = por %p70, %p71
      %p73 = scmp.ne.s32.totalorder %s62, %s63
      %p74 = scmp.eq.s32.totalorder %s16, 0
      %p75 = por %p73, %p74
      %p76 = scmp.ne.s32.totalorder %s62, %s63
      %p77 = scmp.eq.s32.totalorder %s17, 1
      %p78 = por %p76, %p77
      %p80 = scmp.ne.s32.totalorder %s63, %s79
      %p81 = scmp.eq.s32.totalorder %s17, 0
      %p82 = por %p80, %p81
      %s84 = sadd.s32 %s83, 1
      %p87 = scmp.eq.s32.totalorder %s11, 1
      %p88 = scmp.ne.s32.totalorder %s83, %s85
      %p89 = scmp.eq.s32.totalorder %s11, 0
      %p90 = por %p88, %p89
      %p91 = scmp.ne.s32.totalorder %s83, %s85
      %p92 = scmp.eq.s32.totalorder %s16, 1
      %p93 = por %p91, %p92
      %p94 = scmp.ne.s32.totalorder %s85, %s86
      %p95 = scmp.eq.s32.totalorder %s16, 0
      %p96 = por %p94, %p95
      %p97 = scmp.ne.s32.totalorder %s85, %s86
      %p98 = scmp.eq.s32.totalorder %s17, 1
      %p99 = por %p97, %p98
      %p101 = scmp.ne.s32.totalorder %s86, %s100
      %p102 = scmp.eq.s32.totalorder %s17, 0
      %p103 = por %p101, %p102
      %p104 = scmp.le.s32.totalorder 1, %s11
      %p105 = scmp.lt.s32.totalorder %s11, 3
      %p106 = pnand %p104, %p105
      %p107 = pneg %p106
      // Predicated region
      $region9: #{tpu_custom_call.1} parent=5 // pred_check
        _
      $region10: #{tpu_custom_call.1} parent=5 // pred_check_branch
        %109 = sbr.rel (%p106) target = $region12
      $region11: #{tpu_custom_call.1} parent=5 // pred_region
        %s110 = ssub.s32 %s11, 1
        // Predicated region
        $region13: #{tpu_custom_call.1} parent=11 // pred_check
          %p111 = pneg %p49
        $region14: #{tpu_custom_call.1} parent=11 // pred_check_branch
          %113 = sbr.rel (%p111) target = $region16
        $region15: #{tpu_custom_call.1} parent=11 // pred_region
          %s114 = smul.u32 2, %s21
          %116 = vsyncadd [#allocation7], 0
          %s117 = smul.addr %s114, 8
          %s118 = scalar_lea.hbm %s0, %s117
          %s119 = sshll.u32 %s118, 4
          %s120 = int_to_ptr.hbm [resolvable:$true] %s119
          %s121 = sshll.u32 [#allocation6], 4
          %s122 = int_to_ptr.vmem [resolvable:$true] %s121
          %127 = dma.hbm_to_vmem [thread:$0]  %s120, 256, %s122, [#allocation7], 128, 128, 8
        $region16: #{tpu_custom_call.1} parent=11 // pred_fallthru
          _
        // Predicated region
        $region17: #{tpu_custom_call.1} parent=11 // pred_check
          %p128 = pneg %p75
        $region18: #{tpu_custom_call.1} parent=11 // pred_check_branch
          %130 = sbr.rel (%p128) target = $region20
        $region19: #{tpu_custom_call.1} parent=11 // pred_region
          %s131 = smul.u32 2, %s21
          %133 = vsyncadd [#allocation10], 0
          %s134 = smul.addr %s131, 8
          %s135 = scalar_lea.hbm %s1, %s134
          %s136 = sshll.u32 %s135, 4
          %s137 = int_to_ptr.hbm [resolvable:$true] %s136
          %s138 = sshll.u32 [#allocation9], 4
          %s139 = int_to_ptr.vmem [resolvable:$true] %s138
          %144 = dma.hbm_to_vmem [thread:$0]  %s137, 256, %s139, [#allocation10], 128, 128, 8
        $region20: #{tpu_custom_call.1} parent=11 // pred_fallthru
          _
      $region12: #{tpu_custom_call.1} parent=5 // pred_fallthru
        _
      %p145 = scmp.lt.s32.totalorder %s11, 2
      // Predicated region
      $region21: #{tpu_custom_call.1} parent=5 // pred_check
        %p146 = pneg %p145
      $region22: #{tpu_custom_call.1} parent=5 // pred_check_branch
        %148 = sbr.rel (%p146) target = $region24
      $region23: #{tpu_custom_call.1} parent=5 // pred_region
        _
      $region24: #{tpu_custom_call.1} parent=5 // pred_fallthru
        _
      %p149 = scmp.le.s32.totalorder 1, %s11
      %p150 = scmp.lt.s32.totalorder %s11, 3
      %p151 = pnand %p149, %p150
      %p152 = pneg %p151
      // Predicated region
      $region25: #{tpu_custom_call.1} parent=5 // pred_check
        _
      $region26: #{tpu_custom_call.1} parent=5 // pred_check_branch
        %154 = sbr.rel (%p151) target = $region28
      $region27: #{tpu_custom_call.1} parent=5 // pred_region
        %s155 = ssub.s32 %s11, 1
        // Predicated region
        $region29: #{tpu_custom_call.1} parent=27 // pred_check
          %p156 = pneg %p49
        $region30: #{tpu_custom_call.1} parent=27 // pred_check_branch
          %158 = sbr.rel (%p156) target = $region32
        $region31: #{tpu_custom_call.1} parent=27 // pred_region
          %160 = dma.done [#allocation7], 256
        $region32: #{tpu_custom_call.1} parent=27 // pred_fallthru
          _
        // Predicated region
        $region33: #{tpu_custom_call.1} parent=27 // pred_check
          %p161 = pneg %p75
        $region34: #{tpu_custom_call.1} parent=27 // pred_check_branch
          %163 = sbr.rel (%p161) target = $region36
        $region35: #{tpu_custom_call.1} parent=27 // pred_region
          %165 = dma.done [#allocation10], 256
        $region36: #{tpu_custom_call.1} parent=27 // pred_fallthru
          _
        %p166 = pneg %p49
        %p167 = pneg %p46
        %p168 = pneg %p75
        %p169 = pneg %p72
        %p170 = pneg %p96
        %p171 = pneg %p93
        %s172 = smul.u32 2, %s21
        %s173 = smul.u32 2, %s21
        %p174 = scmp.eq.s32.totalorder %s20, 0
        %p175 = scmp.eq.s32.totalorder %s21, 0
        %p176 = pnand %p174, %p175
        %p177 = pneg %p176
        // Predicated region
        $region37: #{tpu_custom_call.1} parent=27 // pred_check
          _
        $region38: #{tpu_custom_call.1} parent=27 // pred_check_branch
          %179 = sbr.rel (%p176) target = $region40
        $region39: #{tpu_custom_call.1} parent=27 // pred_region
          %180 = vst [vmem:[#allocation2] sm:$0xff] 0.0
          %181 = vst [vmem:[#allocation3] sm:$0xff] 0.0
          %182 = vst [vmem:[#allocation4] sm:$0xff] 0.0
        $region40: #{tpu_custom_call.1} parent=27 // pred_fallthru
          _
        %v183 = vld [vmem:[#allocation6] sm:$0xff]
        %v184 = vld [vmem:[#allocation6 + $0x8] sm:$0xff]
        %v185 = vld [vmem:[#allocation9] sm:$0xff]
        %v186 = vld [vmem:[#allocation9 + $0x8] sm:$0xff]
        %v187 = vlaneseq
        %v188 = vshrl.u32 %v187, 7
        %v189 = vadd.s32 %v188, 8
        %s190 = smul.u32 %s21, 16
        %v191 = vstv %s190
        %v192 = vadd.s32 %v188, %v191
        %v193 = vadd.s32 %v189, %v191
        %vm194 = vcmp.lt.s32.totalorder %v192, 16
        %vm195 = vcmp.lt.s32.totalorder %v193, 16
        %vm196 = vcmp.gt.f32.partialorder %v185, 1e-05
        %vm197 = vcmp.gt.f32.partialorder %v186, 1e-05
        %vm198 = vmand %vm194, %vm196
        %vm199 = vmand %vm195, %vm197
        %v200 = vsub.f32 %v183, %v185
        %v201 = vsub.f32 %v184, %v186
        %v202 = vand.u32 2147483647, %v200
        %v203 = vand.u32 2147483647, %v201
        // Predicated region
        $region41: #{tpu_custom_call.1} parent=27 // pred_check
          %p204 = pneg %p174
        $region42: #{tpu_custom_call.1} parent=27 // pred_check_branch
          %206 = sbr.rel (%p204) target = $region44
        $region43: #{tpu_custom_call.1} parent=27 // pred_region
          %v207 = vsel %vm198, %v202, 0.0
          %v208 = vsel %vm199, %v203, 0.0
          %v209 = vsel %vm198, 1, 0
          %v210 = vsel %vm199, 1, 0
          %v211 = vcvt.s32.f32 %v209
          %v212 = vcvt.s32.f32 %v210
          %v213 = vld [vmem:[#allocation2] sm:$0xff]
          %v214 = vmax.f32 %v207, %v208
          %v215 = vmax.f32 %v213, %v214
          %216 = vst [vmem:[#allocation2] sm:$0xff] %v215
          %v217 = vld [vmem:[#allocation3] sm:$0xff]
          %v218 = vadd.f32 %v211, %v212
          %v219 = vadd.f32 %v217, %v218
          %220 = vst [vmem:[#allocation3] sm:$0xff] %v219
          // Predicated region
          $region45: #{tpu_custom_call.1} parent=43 // pred_check
            %p221 = pneg %p175
          $region46: #{tpu_custom_call.1} parent=43 // pred_check_branch
            %223 = sbr.rel (%p221) target = $region48
          $region47: #{tpu_custom_call.1} parent=43 // pred_region
            %v224 = vld [vmem:[#allocation2] sm:$0xff]
            %225 = vmax.xlane.f32.xlu0 %v224
            %v226 = vpop.xlane.xlu0 %225
            %v227 = vrot.slane %v226, 4
            %v228 = vmax.f32 %v226, %v227
            %v229 = vrot.slane %v228, 2
            %v230 = vmax.f32 %v228, %v229
            %v231 = vrot.slane %v230, 1
            %v232 = vmax.f32 %v230, %v231
            %s233 = vtos %v232
            %s234 = smul.f32 %s233, 0.5
            %s235 = scalar_lea.smem [#allocation5], 0
            %236 = sst [smem:[%s235]] %s234
          $region48: #{tpu_custom_call.1} parent=43 // pred_fallthru
            _
        $region44: #{tpu_custom_call.1} parent=27 // pred_fallthru
          _
        %p237 = scmp.eq.s32.totalorder %s20, 1
        // Predicated region
        $region49: #{tpu_custom_call.1} parent=27 // pred_check
          %p238 = pneg %p237
        $region50: #{tpu_custom_call.1} parent=27 // pred_check_branch
          %240 = sbr.rel (%p238) target = $region52
        $region51: #{tpu_custom_call.1} parent=27 // pred_region
          %s241 = sld [smem:[#allocation5]]
          %s242 = smul.f32 %s241, 2.0
          %s243 = sadd.f32 %s242, 1e-05
          %v244 = vstv %s243
          %v245 = vrcp.pop %v244
          %v246 = vmul.f32 %v244, %v245
          %v247 = vsub.f32 1.0, %v246
          %v248 = vmul.f32 %v245, %v247
          %v249 = vadd.f32 %v245, %v248
          %vm250 = vweird.f32 %v244
          %vm251 = vweird.f32 %v245
          %vm252 = vmor %vm250, %vm251
          %v253 = vsel %vm252, %v245, %v249
          %v254 = vand.u32 2147483647, %v244
          %vm255 = vcmp.eq.f32.partialorder %v254, 8.507059e+37
          %v256 = vand.u32 %v244, 2147483648
          %v257 = vor.u32 1.1754944e-38, %v256
          %v258 = vsel %vm255, %v257, %v253
          %s259 = vtos %v258
          %v260 = vmul.f32 %v202, %v202
          %v261 = vmul.f32 %v203, %v203
          %s262 = smul.f32 %s241, %s241
          %v263 = vstv %s262
          %v264 = vadd.f32 %v260, %v263
          %v265 = vadd.f32 %v261, %v263
          %v266 = vstv %s259
          %v267 = vmul.f32 %v264, %v266
          %v268 = vmul.f32 %v265, %v266
          %v269 = vstv %s241
          %vm270 = vcmp.gt.f32.partialorder %v202, %v269
          %vm271 = vcmp.gt.f32.partialorder %v203, %v269
          %v272 = vsel %vm270, %v267, %v202
          %v273 = vsel %vm271, %v268, %v203
          %v274 = vsel %vm198, %v272, 0.0
          %v275 = vsel %vm199, %v273, 0.0
          %v276 = vld [vmem:[#allocation4] sm:$0xff]
          %v277 = vadd.f32 %v274, %v275
          %v278 = vadd.f32 %v276, %v277
          %279 = vst [vmem:[#allocation4] sm:$0xff] %v278
          // Predicated region
          $region53: #{tpu_custom_call.1} parent=51 // pred_check
            %p280 = pneg %p175
          $region54: #{tpu_custom_call.1} parent=51 // pred_check_branch
            %282 = sbr.rel (%p280) target = $region56
          $region55: #{tpu_custom_call.1} parent=51 // pred_region
            %v283 = vld [vmem:[#allocation4] sm:$0xff]
            %284 = vadd.xlane.f32.xlu0 %v283
            %v285 = vpop.xlane.xlu0 %284
            %v286 = vrot.slane %v285, 4
            %v287 = vadd.f32 %v285, %v286
            %v288 = vrot.slane %v287, 2
            %v289 = vadd.f32 %v287, %v288
            %v290 = vrot.slane %v289, 1
            %v291 = vadd.f32 %v289, %v290
            %s292 = vtos %v291
            %v293 = vld [vmem:[#allocation3] sm:$0xff]
            %294 = vadd.xlane.f32.xlu0 %v293
            %v295 = vpop.xlane.xlu0 %294
            %v296 = vrot.slane %v295, 4
            %v297 = vadd.f32 %v295, %v296
            %v298 = vrot.slane %v297, 2
            %v299 = vadd.f32 %v297, %v298
            %v300 = vrot.slane %v299, 1
            %v301 = vadd.f32 %v299, %v300
            %s302 = vtos %v301
            %v303 = vstv %s302
            %v304 = vrcp.pop %v303
            %v305 = vmul.f32 %v303, %v304
            %v306 = vsub.f32 1.0, %v305
            %v307 = vmul.f32 %v304, %v306
            %v308 = vadd.f32 %v304, %v307
            %vm309 = vweird.f32 %v303
            %vm310 = vweird.f32 %v304
            %vm311 = vmor %vm309, %vm310
            %v312 = vsel %vm311, %v304, %v308
            %v313 = vand.u32 2147483647, %v303
            %vm314 = vcmp.eq.f32.partialorder %v313, 8.507059e+37
            %v315 = vand.u32 %v303, 2147483648
            %v316 = vor.u32 1.1754944e-38, %v315
            %v317 = vsel %vm314, %v316, %v312
            %s318 = vtos %v317
            %s319 = smul.f32 %s292, %s318
            %s320 = scalar_lea.smem [#allocation11], 0
            %321 = sst [smem:[%s320]] %s319
          $region56: #{tpu_custom_call.1} parent=51 // pred_fallthru
            _
        $region52: #{tpu_custom_call.1} parent=27 // pred_fallthru
          _
        // Predicated region
        $region57: #{tpu_custom_call.1} parent=27 // pred_check
          %p322 = pneg %p93
        $region58: #{tpu_custom_call.1} parent=27 // pred_check_branch
          %324 = sbr.rel (%p322) target = $region60
        $region59: #{tpu_custom_call.1} parent=27 // pred_region
          %326 = vsyncadd [#allocation8], 0
          %s328 = sshll.u32 %s2, 4
          %s329 = int_to_ptr.hbm [resolvable:$true] %s328
          %331 = dma.smem_to_hbm [#allocation11], 16, %s329, [#allocation8]
        $region60: #{tpu_custom_call.1} parent=27 // pred_fallthru
          _
        // Predicated region
        $region61: #{tpu_custom_call.1} parent=27 // pred_check
          %p332 = pneg %p93
        $region62: #{tpu_custom_call.1} parent=27 // pred_check_branch
          %334 = sbr.rel (%p332) target = $region64
        $region63: #{tpu_custom_call.1} parent=27 // pred_region
          %336 = dma.done [#allocation8], 16
        $region64: #{tpu_custom_call.1} parent=27 // pred_fallthru
          _
        %337 = sfence
      $region28: #{tpu_custom_call.1} parent=5 // pred_fallthru
        _
      %p338 = scmp.le.s32.totalorder 2, %s11
      // Predicated region
      $region65: #{tpu_custom_call.1} parent=5 // pred_check
        %p339 = pneg %p338
      $region66: #{tpu_custom_call.1} parent=5 // pred_check_branch
        %341 = sbr.rel (%p339) target = $region68
      $region67: #{tpu_custom_call.1} parent=5 // pred_region
        %s342 = ssub.s32 %s11, 2
      $region68: #{tpu_custom_call.1} parent=5 // pred_fallthru
        _
    $region6: #{tpu_custom_call.1} parent=1 // loop_footer
      %s15 = sadd.s32 1, %s11
    $region7: #{tpu_custom_call.1} parent=1 // loop_footer_branch
      %10 = sbr.rel target = $region3
    $region8: #{tpu_custom_call.1} parent=1 // loop_exit
      _
    %343 = vsyncpa [#allocation7], 1
    %s344 = scalar_lea.sflag [#allocation7], 1
    %345 = vsyncpa %s344, 1
    %346 = vsyncpa [#allocation10], 1
    %347 = vsyncpa [#allocation8], 1
    %s348 = scalar_lea.sflag [#allocation8], 1
    %349 = vsyncpa %s348, 1

</llo_original>
